<compile_context>
chip_gen: v6e
topology: v6e:2x2x1
jax: 0.10.0
libtpu: 0.0.40
codegen_flags: <defaults>
</compile_context>

<pallas_src>
import numpy as np

import jax
import jax.numpy as jnp
from jax import lax
from jax.experimental import pallas as pl
from jax.experimental.pallas import tpu as pltpu


def _round_up(x, m):
    return (x + m - 1) // m * m


def _make_lse_kernel(tm, tv, vocab, ragged):
    """Pass 1: online logsumexp over vocab tiles (vocab = outer grid axis)."""

    def kernel(x_ref, w_ref, b_ref, lse_ref, m_sc, l_sc):
        j = pl.program_id(0)                      # vocab tile (outer)
        i = pl.program_id(1)                      # row tile   (inner)
        rows = pl.ds(pl.multiple_of(i * tm, tm), tm)

        @pl.when(j == 0)
        def _():
            m_sc[rows, :] = jnp.full((tm, 1), -jnp.inf, jnp.float32)
            l_sc[rows, :] = jnp.zeros((tm, 1), jnp.float32)

        logits = jnp.dot(x_ref[...], w_ref[...],
                         preferred_element_type=jnp.float32) + b_ref[...]
        if ragged:
            col = j * tv + lax.broadcasted_iota(jnp.int32, logits.shape, 1)
            logits = jnp.where(col < vocab, logits, -1e30)

        m_prev = m_sc[rows, :]
        l_prev = l_sc[rows, :]
        m_new = jnp.maximum(m_prev, jnp.max(logits, axis=-1, keepdims=True))
        l_new = (jnp.exp(m_prev - m_new) * l_prev
                 + jnp.sum(jnp.exp(logits - m_new), axis=-1, keepdims=True))
        m_sc[rows, :] = m_new
        l_sc[rows, :] = l_new

        # Write the running lse every step; the last vocab tile (executed last
        # in grid order) leaves the final, correct value in HBM.
        lse_ref[...] = m_new + jnp.log(l_new)

    return kernel


def _softmax_kernel(x_ref, w_ref, b_ref, lse_ref, o_ref):
    """Pass 2: recompute the logits tile and write exp(logits - lse)."""
    logits = jnp.dot(x_ref[...], w_ref[...],
                     preferred_element_type=jnp.float32) + b_ref[...]
    o_ref[...] = jnp.exp(logits - lse_ref[...]).astype(o_ref.dtype)


def _pick_tiles(M, d_model, vocab, c_isz, o_isz, tm_max, tv_max):
    """Pick (tm, tv) so double-buffered blocks fit the device's VMEM."""
    tm = min(tm_max, _round_up(M, 8))
    tv = min(tv_max, _round_up(vocab, 128))
    try:
        vmem_bytes = int(pltpu.get_tpu_info().vmem_capacity_bytes)
    except Exception:
        vmem_bytes = 64 << 20       # conservative default (v7x per-TC VMEM)
    budget = int(vmem_bytes * 0.55)

    def usage(tm_, tv_):
        return int(2 * tm_ * d_model * c_isz        # x block (double-buffered)
                   + 2 * d_model * tv_ * c_isz      # w block
                   + 2 * 8 * tv_ * 4                # bias block (sublane pad)
                   + 2 * tm_ * tv_ * o_isz          # out block (pass 2)
                   + 2 * tm_ * 128 * 4)             # lse block (lane pad)

    while usage(tm, tv) > budget and tv > 128:
        tv = max(128, (tv // 2) // 128 * 128)
    while usage(tm, tv) > budget and tm > 8:
        tm = max(8, _round_up(tm // 2, 8))
    return tm, tv, vmem_bytes, usage(tm, tv)


def generator_forward(x, w, b, *, tm=None, tv=None,
                      compute_dtype=jnp.bfloat16, out_dtype=None,
                      vmem_limit_bytes=None):
    """softmax(x @ w + b, axis=-1).

    x: [..., d_model]
    w: [d_model, vocab]  (transposed vs. torch nn.Linear.weight)
    b: [vocab]
    returns: [..., vocab] probabilities in out_dtype (default: x.dtype;
             pass bfloat16 to halve the output HBM write if acceptable).
    """
    *lead, d_model = x.shape
    vocab = w.shape[1]
    out_dtype = x.dtype if out_dtype is None else out_dtype

    M = int(np.prod(lead)) if lead else 1
    M = max(M, 1)

    c_isz = np.dtype(compute_dtype).itemsize
    o_isz = np.dtype(out_dtype).itemsize

    tm, tv, vmem_bytes, vmem_used = _pick_tiles(
        M, d_model, vocab, c_isz, o_isz,
        tm_max=256 if tm is None else int(tm),
        tv_max=2048 if tv is None else int(tv))

    M_pad = _round_up(M, tm)
    nrt = M_pad // tm
    nvt = pl.cdiv(vocab, tv)
    ragged = (vocab % tv) != 0

    # Pad rows of x only (cheap); the weight is never padded/copied in HBM.
    x2d = x.reshape(M, d_model)
    if M_pad != M:
        x2d = jnp.pad(x2d, ((0, M_pad - M), (0, 0)))
    x2d = x2d.astype(compute_dtype)
    w_c = w.astype(compute_dtype)
    b2d = b.astype(jnp.float32).reshape(1, vocab)

    # Grid is (vocab tiles, row tiles): weight block constant across the inner
    # axis -> streamed from HBM once per pass.
    x_spec = pl.BlockSpec((tm, d_model), lambda j, i: (i, 0))
    w_spec = pl.BlockSpec((d_model, tv), lambda j, i: (0, j))
    b_spec = pl.BlockSpec((1, tv), lambda j, i: (0, j))
    lse_spec = pl.BlockSpec((tm, 1), lambda j, i: (i, 0))
    out_spec = pl.BlockSpec((tm, tv), lambda j, i: (i, j))

    if vmem_limit_bytes is None:
        stats_bytes = 2 * M_pad * 128 * 4          # (M_pad,1) f32 scratch x2
        vmem_limit_bytes = vmem_used + stats_bytes + (8 << 20)
        vmem_limit_bytes = max(vmem_limit_bytes, 32 << 20)
        vmem_limit_bytes = min(vmem_limit_bytes, vmem_bytes)
    compiler_kwargs = dict(vmem_limit_bytes=int(vmem_limit_bytes))

    flops = 2 * M_pad * d_model * vocab
    w_bytes = d_model * vocab * c_isz              # streamed once per pass
    x_bytes = M_pad * d_model * c_isz              # streamed nvt times
    b_bytes = vocab * 4
    lse_bytes = M_pad * 4

    cost1 = pl.CostEstimate(
        flops=int(flops), transcendentals=int(M_pad * vocab),
        bytes_accessed=int(w_bytes + nvt * x_bytes + b_bytes
                           + nvt * lse_bytes))
    cost2 = pl.CostEstimate(
        flops=int(flops), transcendentals=int(M_pad * vocab),
        bytes_accessed=int(w_bytes + nvt * x_bytes + b_bytes
                           + nvt * lse_bytes + M_pad * vocab * o_isz))

    # ---- Pass 1: per-row logsumexp over all vocab tiles ---------------------
    lse = pl.pallas_call(
        _make_lse_kernel(tm, tv, vocab, ragged),
        out_shape=jax.ShapeDtypeStruct((M_pad, 1), jnp.float32),
        grid_spec=pltpu.PrefetchScalarGridSpec(
            num_scalar_prefetch=0,
            grid=(nvt, nrt),
            in_specs=[x_spec, w_spec, b_spec],
            out_specs=lse_spec,
            scratch_shapes=[pltpu.VMEM((M_pad, 1), jnp.float32),
                            pltpu.VMEM((M_pad, 1), jnp.float32)],
        ),
        compiler_params=pltpu.CompilerParams(
            dimension_semantics=("arbitrary", "arbitrary"), **compiler_kwargs),
        cost_estimate=cost1,
    )(x2d, w_c, b2d)

    # ---- Pass 2: recompute logits per tile, normalize, write output ---------
    out2d = pl.pallas_call(
        _softmax_kernel,
        out_shape=jax.ShapeDtypeStruct((M_pad, vocab), out_dtype),
        grid_spec=pltpu.PrefetchScalarGridSpec(
            num_scalar_prefetch=0,
            grid=(nvt, nrt),
            in_specs=[x_spec, w_spec, b_spec, lse_spec],
            out_specs=out_spec,
        ),
        compiler_params=pltpu.CompilerParams(
            dimension_semantics=("parallel", "parallel"), **compiler_kwargs),
        cost_estimate=cost2,
    )(x2d, w_c, b2d, lse)

    out2d = out2d[:M, :]
    return out2d.reshape(*lead, vocab)


if __name__ == "__main__":
    # Small shapes consistent with the module: batch=2, seq=8, d_model=32, vocab=128
    batch, seq, d_model, vocab = 2, 8, 32, 128

    key = jax.random.PRNGKey(0)
    kx, kw, kb = jax.random.split(key, 3)

    # Deterministic parameter init (mimics nn.Linear uniform(-1/sqrt(d), 1/sqrt(d)))
    bound = 1.0 / (d_model ** 0.5)
    w = jax.random.uniform(kw, (d_model, vocab), jnp.float32, -bound, bound)
    b = jax.random.uniform(kb, (vocab,), jnp.float32, -bound, bound)
    x = jax.random.normal(kx, (batch, seq, d_model), jnp.float32)

    out = generator_forward(x, w, b)
    out = jax.block_until_ready(out)

    # Reference using the same bf16-matmul / f32-accumulate recipe as the kernel.
    ref_logits = jnp.einsum(
        "bsd,dv->bsv",
        x.astype(jnp.bfloat16), w.astype(jnp.bfloat16),
        preferred_element_type=jnp.float32) + b
    ref = jax.nn.softmax(ref_logits, axis=-1)

    assert out.shape == (batch, seq, vocab)
    assert jnp.allclose(out, ref, atol=5e-4, rtol=5e-3)
    # Exact lse normalization (no approx reciprocal): rows sum to 1 tightly.
    assert jnp.allclose(jnp.sum(out.astype(jnp.float32), axis=-1), 1.0, atol=1e-3)

    print("KERNEL_OK")
</pallas_src>

<mosaic_0001>
module attributes {stable_mosaic.version = 11 : i64} {
  func.func @kernel(%arg0: i32, %arg1: i32, %arg2: memref<16x32xbf16, #tpu.memory_space<vmem>>, %arg3: memref<32x128xbf16, #tpu.memory_space<vmem>>, %arg4: memref<1x128xf32, #tpu.memory_space<vmem>>, %arg5: memref<16x1xf32, #tpu.memory_space<vmem>>, %arg6: memref<16x1xf32, #tpu.memory_space<vmem>>, %arg7: memref<16x1xf32, #tpu.memory_space<vmem>>) attributes {dimension_semantics = [#tpu.dimension_semantics<arbitrary>, #tpu.dimension_semantics<arbitrary>], iteration_bounds = array<i64: 1, 1>, scalar_prefetch = 0 : i64, scratch_operands = 2 : i64, tpu.core_type = #tpu.core_type<tc>, window_params = [{transform_indices = @transform_0, window_bounds = array<i64: 16, 32>}, {transform_indices = @transform_1, window_bounds = array<i64: 32, 128>}, {transform_indices = @transform_2, window_bounds = array<i64: 1, 128>}, {transform_indices = @transform_3, window_bounds = array<i64: 16, 1>}]} {
    %c16_i32 = arith.constant 16 : i32
    %0 = arith.muli %arg1, %c16_i32 : i32
    %1 = tpu.assume_multiple %0, 16 : i32
    %c0_i32 = arith.constant 0 : i32
    %2 = arith.cmpi eq, %arg0, %c0_i32 : i32
    %3 = arith.extui %2 : i1 to i32
    %c0_i32_0 = arith.constant 0 : i32
    %4 = arith.cmpi ne, %3, %c0_i32_0 : i32
    scf.if %4 {
      %cst_14 = arith.constant 0xFF800000 : f32
      %34 = vector.broadcast %cst_14 : f32 to vector<16x1xf32>
      %35 = arith.index_cast %1 : i32 to index
      %c0_15 = arith.constant 0 : index
      %36 = vector.load %arg6[%35, %c0_15] : memref<16x1xf32, #tpu.memory_space<vmem>>, vector<16x1xf32>
      tpu.vector_store %arg6[%35, %c0_15], %34 {strides = array<i32>} : memref<16x1xf32, #tpu.memory_space<vmem>>, vector<16x1xf32>,
      %cst_16 = arith.constant 0.000000e+00 : f32
      %37 = vector.broadcast %cst_16 : f32 to vector<16x1xf32>
      %38 = arith.index_cast %1 : i32 to index
      %c0_17 = arith.constant 0 : index
      %39 = vector.load %arg7[%38, %c0_17] : memref<16x1xf32, #tpu.memory_space<vmem>>, vector<16x1xf32>
      tpu.vector_store %arg7[%38, %c0_17], %37 {strides = array<i32>} : memref<16x1xf32, #tpu.memory_space<vmem>>, vector<16x1xf32>,
    } else {
    }
    %c0 = arith.constant 0 : index
    %c0_1 = arith.constant 0 : index
    %5 = vector.load %arg2[%c0, %c0_1] : memref<16x32xbf16, #tpu.memory_space<vmem>>, vector<16x32xbf16>
    %c0_2 = arith.constant 0 : index
    %c0_3 = arith.constant 0 : index
    %6 = vector.load %arg3[%c0_2, %c0_3] : memref<32x128xbf16, #tpu.memory_space<vmem>>, vector<32x128xbf16>
    %cst = arith.constant dense<0.000000e+00> : vector<16x128xf32>
    %7 = tpu.matmul %5, %6, %cst {dimension_numbers = #tpu.dot_dimension_numbers<[1], [0], [0], [1], [0, 0, 1, 1], [], []>} : vector<16x32xbf16>, vector<32x128xbf16>, vector<16x128xf32> -> vector<16x128xf32>
    %c0_4 = arith.constant 0 : index
    %c0_5 = arith.constant 0 : index
    %8 = vector.load %arg4[%c0_4, %c0_5] : memref<1x128xf32, #tpu.memory_space<vmem>>, vector<1x128xf32>
    %9 = vector.broadcast %8 : vector<1x128xf32> to vector<16x128xf32>
    %10 = arith.addf %7, %9 : vector<16x128xf32>
    %11 = arith.index_cast %1 : i32 to index
    %c0_6 = arith.constant 0 : index
    %12 = vector.load %arg6[%11, %c0_6] : memref<16x1xf32, #tpu.memory_space<vmem>>, vector<16x1xf32>
    %13 = arith.index_cast %1 : i32 to index
    %c0_7 = arith.constant 0 : index
    %14 = vector.load %arg7[%13, %c0_7] : memref<16x1xf32, #tpu.memory_space<vmem>>, vector<16x1xf32>
    %cst_8 = arith.constant dense<0xFF800000> : vector<16xf32>
    %15 = vector.multi_reduction <maximumf>, %10, %cst_8 [1] : vector<16x128xf32> to vector<16xf32>
    %16 = vector.shape_cast %15 : vector<16xf32> to vector<16x1xf32>
    %17 = arith.maximumf %12, %16 : vector<16x1xf32>
    %18 = arith.subf %12, %17 : vector<16x1xf32>
    %19 = math.exp %18 : vector<16x1xf32>
    %20 = arith.mulf %19, %14 : vector<16x1xf32>
    %21 = vector.broadcast %17 : vector<16x1xf32> to vector<16x128xf32>
    %22 = arith.subf %10, %21 : vector<16x128xf32>
    %23 = math.exp %22 : vector<16x128xf32>
    %cst_9 = arith.constant dense<0.000000e+00> : vector<16xf32>
    %24 = vector.multi_reduction <add>, %23, %cst_9 [1] : vector<16x128xf32> to vector<16xf32>
    %25 = vector.shape_cast %24 : vector<16xf32> to vector<16x1xf32>
    %26 = arith.addf %20, %25 : vector<16x1xf32>
    %27 = arith.index_cast %1 : i32 to index
    %c0_10 = arith.constant 0 : index
    %28 = vector.load %arg6[%27, %c0_10] : memref<16x1xf32, #tpu.memory_space<vmem>>, vector<16x1xf32>
    tpu.vector_store %arg6[%27, %c0_10], %17 {strides = array<i32>} : memref<16x1xf32, #tpu.memory_space<vmem>>, vector<16x1xf32>,
    %29 = arith.index_cast %1 : i32 to index
    %c0_11 = arith.constant 0 : index
    %30 = vector.load %arg7[%29, %c0_11] : memref<16x1xf32, #tpu.memory_space<vmem>>, vector<16x1xf32>
    tpu.vector_store %arg7[%29, %c0_11], %26 {strides = array<i32>} : memref<16x1xf32, #tpu.memory_space<vmem>>, vector<16x1xf32>,
    %31 = math.log %26 : vector<16x1xf32>
    %32 = arith.addf %17, %31 : vector<16x1xf32>
    %c0_12 = arith.constant 0 : index
    %c0_13 = arith.constant 0 : index
    %33 = vector.load %arg5[%c0_12, %c0_13] : memref<16x1xf32, #tpu.memory_space<vmem>>, vector<16x1xf32>
    tpu.vector_store %arg5[%c0_12, %c0_13], %32 {strides = array<i32>} : memref<16x1xf32, #tpu.memory_space<vmem>>, vector<16x1xf32>,
    return
  }
  func.func @transform_0(%arg0: i32, %arg1: i32) -> (i32, i32) {
    %c0_i32 = arith.constant 0 : i32
    %c0_i32_0 = arith.constant 0 : i32
    return %arg1, %c0_i32 : i32, i32
  }
  func.func @transform_1(%arg0: i32, %arg1: i32) -> (i32, i32) {
    %c0_i32 = arith.constant 0 : i32
    %c0_i32_0 = arith.constant 0 : i32
    return %c0_i32, %arg0 : i32, i32
  }
  func.func @transform_2(%arg0: i32, %arg1: i32) -> (i32, i32) {
    %c0_i32 = arith.constant 0 : i32
    %c0_i32_0 = arith.constant 0 : i32
    return %c0_i32, %arg0 : i32, i32
  }
  func.func @transform_3(%arg0: i32, %arg1: i32) -> (i32, i32) {
    %c0_i32 = arith.constant 0 : i32
    %c0_i32_0 = arith.constant 0 : i32
    return %arg1, %c0_i32 : i32, i32
  }
}

</mosaic_0001>

<llo_original>
// kernel: tpu_custom_call.1
$region0: #{tpu_custom_call.1}
  #allocation0 [shape = 'u32[]', space=smem, size = 0x4, offset = 0x4, fixed_abs, tag = 'smem constant byte address 0x4 - core index']
  #allocation1 [shape = 'u32[144,128]{1,0:T(1,128)}', space=vmem, size = 0x12000, scoped, tag = 'internal scratch']
  #allocation2 [shape = 'f32[16,1]{1,0:T(8,128)}', space=vmem, size = 0x2000, scoped, tag = 'scratch operand']
  #allocation3 [shape = 'f32[16,1]{1,0:T(8,128)}', space=vmem, size = 0x2000, scoped, tag = 'scratch operand']
  %s0 = inlined_call_operand.hbm [shape: bf16[16,32], index: 0, kind: input, shape index: {}]
  %s1 = inlined_call_operand.hbm [shape: bf16[32,128], index: 1, kind: input, shape index: {}]
  %s2 = inlined_call_operand.vmem [shape: f32[1,128], index: 2, kind: input, shape index: {}]
  %s3 = inlined_call_operand.vmem [shape: f32[16,1], index: 3, kind: output, shape index: {}]
  %s4 = sld [smem:[#allocation0]]
  $region34: #{tpu_custom_call.1} parent=0
    _
  %s6 = ssub.s32 1, %s4
  %s7 = scalar_select 0, %s6, %s4
  $region1: #{tpu_custom_call.1} parent=0
    #allocation4 [shape = 'u8[4096]{0}', space=vmem, size = 0x1000, scoped, tag = 'input window, operand 0, single buffered']
    #allocation5 [shape = 's32[1]{0}', space=sflag, size = 0x4, scoped, tag = 'scoped memory for tpu_custom_call.1']
    #allocation6 [shape = 'u8[8192]{0}', space=vmem, size = 0x2000, scoped, tag = 'input window, operand 1, single buffered']
    #allocation7 [shape = 's32[1]{0}', space=sflag, size = 0x4, scoped, tag = 'scoped memory for tpu_custom_call.1']
    %8 = vsyncpa [#allocation5], 0
    %9 = vsyncpa [#allocation7], 0
    // Predicated region
    $region2: #{tpu_custom_call.1} parent=1 // pred_check
      _
    $region3: #{tpu_custom_call.1} parent=1 // pred_check_branch
      %11 = sbr.rel (0) target = $region5
    $region4: #{tpu_custom_call.1} parent=1 // pred_region
      %s13 = ssub.s32 128, 128
      %14 = vsyncadd [#allocation5], %s13
      %s15 = sshll.u32 [#allocation4], 4
      %s16 = int_to_ptr.vmem [resolvable:$true] %s15
      %21 = dma.hbm_to_vmem [thread:$0]  %s0, 128, %s16, [#allocation5], 64, 64, 4
    $region5: #{tpu_custom_call.1} parent=1 // pred_fallthru
      _
    // Predicated region
    $region6: #{tpu_custom_call.1} parent=1 // pred_check
      _
    $region7: #{tpu_custom_call.1} parent=1 // pred_check_branch
      %23 = sbr.rel (0) target = $region9
    $region8: #{tpu_custom_call.1} parent=1 // pred_region
      %s25 = ssub.s32 256, 256
      %26 = vsyncadd [#allocation7], %s25
      %s27 = sshll.u32 [#allocation6], 4
      %s28 = int_to_ptr.vmem [resolvable:$true] %s27
      %33 = dma.hbm_to_vmem [thread:$0]  %s1, 256, %s28, [#allocation7], 64, 64, 4
    $region9: #{tpu_custom_call.1} parent=1 // pred_fallthru
      _
    // Predicated region
    $region10: #{tpu_custom_call.1} parent=1 // pred_check
      _
    $region11: #{tpu_custom_call.1} parent=1 // pred_check_branch
      %35 = sbr.rel (0) target = $region13
    $region12: #{tpu_custom_call.1} parent=1 // pred_region
      _
    $region13: #{tpu_custom_call.1} parent=1 // pred_fallthru
      _
    // Predicated region
    $region14: #{tpu_custom_call.1} parent=1 // pred_check
      _
    $region15: #{tpu_custom_call.1} parent=1 // pred_check_branch
      %37 = sbr.rel (0) target = $region17
    $region16: #{tpu_custom_call.1} parent=1 // pred_region
      %38 = dma.done [#allocation5], 128
    $region17: #{tpu_custom_call.1} parent=1 // pred_fallthru
      _
    // Predicated region
    $region18: #{tpu_custom_call.1} parent=1 // pred_check
      _
    $region19: #{tpu_custom_call.1} parent=1 // pred_check_branch
      %40 = sbr.rel (0) target = $region21
    $region20: #{tpu_custom_call.1} parent=1 // pred_region
      %41 = dma.done [#allocation7], 256
    $region21: #{tpu_custom_call.1} parent=1 // pred_fallthru
      _
    %s43 = smul.u32 0, 16
    %p44 = scmp.eq.s32.totalorder 0, 0
    // Predicated region
    $region22: #{tpu_custom_call.1} parent=1 // pred_check
      %p45 = pneg %p44
    $region23: #{tpu_custom_call.1} parent=1 // pred_check_branch
      %47 = sbr.rel (%p45) target = $region25
    $region24: #{tpu_custom_call.1} parent=1 // pred_region
      %s48 = scalar_lea.vmem [#allocation2], %s43
      %vm49 = vcmask 7168
      %50 = vst.msk [vmem:[%s48] sm:$0xff] %vm49, -inf
      %51 = vst.msk [vmem:[%s48 + $0x8] sm:$0xff] %vm49, -inf
      %s52 = scalar_lea.vmem [#allocation3], %s43
      %53 = vst.msk [vmem:[%s52] sm:$0xff] %vm49, 0.0
      %54 = vst.msk [vmem:[%s52 + $0x8] sm:$0xff] %vm49, 0.0
    $region25: #{tpu_custom_call.1} parent=1 // pred_fallthru
      _
    %v55 = vld [vmem:[#allocation4] sm:$0xf]
    %v56 = vld [vmem:[#allocation4 + $0x4] sm:$0xf]
    %v57 = vld [vmem:[#allocation6] sm:$0xf]
    %v58 = vld [vmem:[#allocation6 + $0x4] sm:$0xf]
    %v59 = vld [vmem:[#allocation6 + $0x8] sm:$0xf]
    %v60 = vld [vmem:[#allocation6 + $0xc] sm:$0xf]
    %v61 = vld [vmem:[%s2] sm:$0x1]
    %v63 = vlaneseq
    %v64 = vshrl.u32 %v63, 7
    %v65 = vsub.s32 0, %v64
    %v66 = vrot.slane %v61, %v65
    %v70 = vunpack.c.l.b16 %v55
    %v71 = vunpack.c.l.b16 %v56
    %v72 = vpack.c.b16 %v71, %v70
    %v77 = vunpack.c.l.b16 %v57
    %v78 = vunpack.c.l.b16 %v58
    %v79 = vunpack.c.l.b16 %v59
    %v80 = vunpack.c.l.b16 %v60
    %v81 = vpack.c.b16 %v78, %v77
    %v82 = vpack.c.b16 %v80, %v79
    %vm85 = vcmask 261120
    %v87 = vsel %vm85, %v72, 0
    %89 = vmatprep.subr.bf16.mxu0 0
    %90 = vmatpush1.bf16.msra.mxu0 0
    %91 = vmatprep.subr.bf16.mxu0 0
    %92 = vmatpush1.bf16.msra.mxu0 0
    %93 = vmatprep.subr.bf16.mxu0 0
    %94 = vmatpush1.bf16.msra.mxu0 0
    %95 = vmatprep.subr.bf16.mxu0 0
    %96 = vmatpush1.bf16.msra.mxu0 0
    %97 = vmatprep.subr.bf16.mxu0 0
    %98 = vmatpush1.bf16.msra.mxu0 0
    %99 = vmatprep.subr.bf16.mxu0 0
    %100 = vmatpush1.bf16.msra.mxu0 0
    %101 = vmatprep.subr.bf16.mxu0 0
    %102 = vmatpush1.bf16.msra.mxu0 %v82
    %103 = vmatprep.subr.bf16.mxu0 0
    %104 = vmatpush1.bf16.msra.mxu0 %v81
    %105 = vmatprep.subr.bf16.mxu0 0
    %106 = vmatpush2.bf16.msra.mxu0 0
    %107 = vmatprep.subr.bf16.mxu0 0
    %108 = vmatpush2.bf16.msra.mxu0 0
    %109 = vmatprep.subr.bf16.mxu0 0
    %110 = vmatpush2.bf16.msra.mxu0 0
    %111 = vmatprep.subr.bf16.mxu0 0
    %112 = vmatpush2.bf16.msra.mxu0 0
    %113 = vmatprep.subr.bf16.mxu0 0
    %114 = vmatpush2.bf16.msra.mxu0 0
    %115 = vmatprep.subr.bf16.mxu0 0
    %116 = vmatpush2.bf16.msra.mxu0 0
    %117 = vmatprep.subr.bf16.mxu0 0
    %118 = vmatpush2.bf16.msra.mxu0 0
    %119 = vmatprep.subr.bf16.mxu0 0
    %120 = vmatpush2.bf16.msra.mxu0 0
    %121 = vmatprep.mubr.bf16.mxu0 0
    %122 = vmatmul.mubr.bf16.gmra.mxu0 %v87
    %v123 = vpop.f32.mrf.mxu0
    %v124 = vadd.f32 %v66, %v123
    %v125 = vpop.f32.mrf.mxu0
    %v126 = vpop.f32.mrf.mxu0
    %v127 = vadd.f32 %v66, %v126
    %v128 = vpop.f32.mrf.mxu0
    %129 = vdwg.mxu0
    %s130 = scalar_lea.vmem [#allocation2], %s43
    %v131 = vld [vmem:[%s130] sm:$0xff]
    %v132 = vld [vmem:[%s130 + $0x8] sm:$0xff]
    %s133 = scalar_lea.vmem [#allocation3], %s43
    %v134 = vld [vmem:[%s133] sm:$0xff]
    %v135 = vld [vmem:[%s133 + $0x8] sm:$0xff]
    %136 = vmax.xlane.f32.xlu0 %v124
    %v137 = vpop.xlane.xlu0 %136
    %138 = vmax.xlane.f32.xlu0 %v127
    %v139 = vpop.xlane.xlu0 %138
    %v140 = vmax.f32 %v131, %v137
    %v141 = vmax.f32 %v132, %v139
    %v142 = vsub.f32 %v131, %v140
    %v143 = vsub.f32 %v132, %v141
    %v144 = vmul.f32 %v142, 1.442695
    %v145 = vpow.pop %v144
    %v146 = vmul.f32 %v143, 1.442695
    %v147 = vpow.pop %v146
    %v148 = vmul.f32 %v145, %v134
    %v149 = vmul.f32 %v147, %v135
    %151 = vset.pattern.permute.xlu0 0
    %152 = vperm.xlu0 %151, %v140
    %v153 = vpop.permute.xlu0 %152
    %156 = vset.pattern.permute.xlu0 0
    %157 = vperm.xlu0 %156, %v141
    %v158 = vpop.permute.xlu0 %157
    %v160 = vsub.f32 %v124, %v153
    %v161 = vsub.f32 %v127, %v158
    %v162 = vmul.f32 %v160, 1.442695
    %v163 = vpow.pop %v162
    %v164 = vmul.f32 %v161, 1.442695
    %v165 = vpow.pop %v164
    %166 = vadd.xlane.f32.xlu0 %v163
    %v167 = vpop.xlane.xlu0 %166
    %168 = vadd.xlane.f32.xlu0 %v165
    %v169 = vpop.xlane.xlu0 %168
    %v170 = vadd.f32 %v148, %v167
    %v171 = vadd.f32 %v149, %v169
    %vm172 = vcmask 7168
    %173 = vst.msk [vmem:[%s130] sm:$0xff] %vm172, %v140
    %174 = vst.msk [vmem:[%s130 + $0x8] sm:$0xff] %vm172, %v141
    %175 = vst.msk [vmem:[%s133] sm:$0xff] %vm172, %v170
    %176 = vst.msk [vmem:[%s133 + $0x8] sm:$0xff] %vm172, %v171
    %v177 = vlog2.pop %v170
    %v178 = vmul.f32 %v177, 0.6931472
    %v179 = vlog2.pop %v171
    %v180 = vmul.f32 %v179, 0.6931472
    %v181 = vadd.f32 %v140, %v178
    %v182 = vadd.f32 %v141, %v180
    %183 = vst.msk [vmem:[%s3] sm:$0xff] %vm172, %v181
    %184 = vst.msk [vmem:[%s3 + $0x8] sm:$0xff] %vm172, %v182
    // Predicated region
    $region26: #{tpu_custom_call.1} parent=1 // pred_check
      _
    $region27: #{tpu_custom_call.1} parent=1 // pred_check_branch
      %186 = sbr.rel (0) target = $region29
    $region28: #{tpu_custom_call.1} parent=1 // pred_region
      _
    $region29: #{tpu_custom_call.1} parent=1 // pred_fallthru
      _
    // Predicated region
    $region30: #{tpu_custom_call.1} parent=1 // pred_check
      _
    $region31: #{tpu_custom_call.1} parent=1 // pred_check_branch
      %188 = sbr.rel (0) target = $region33
    $region32: #{tpu_custom_call.1} parent=1 // pred_region
      _
    $region33: #{tpu_custom_call.1} parent=1 // pred_fallthru
      _
    %189 = vsyncpa [#allocation5], 1
    %190 = vsyncpa [#allocation7], 1

</llo_original>
